<compile_context>
chip_gen: v7x
topology: tpu7x:2x2x1
jax: 0.10.0
libtpu: 0.0.40
codegen_flags: <defaults>
</compile_context>

<pallas_src>
import functools

import jax
import jax.numpy as jnp
from jax.experimental import pallas as pl
from jax.experimental.pallas import tpu as pltpu


# Conservative per-step VMEM budget for the pipelined slabs. Chosen against
# v7x (32 MiB scoped / 64 MiB physical). On v6e/v5e (128 MiB physical) this
# could be raised together with vmem_limit_bytes if E grows large enough for
# the formula to bind; at small E it never does.
_VMEM_BUDGET_BYTES = 24 << 20
_MAX_TOKEN_TILE = 2048  # sweet spot per HBM-roofline sweep; bounds unroll too


def _choose_token_tile(n_tokens: int, embed_dim: int) -> int:
    """Largest lane-aligned token tile that divides N and fits the VMEM budget.

    Dominant per-step VMEM: double-buffered z-in + zq-out f32 slabs
    ~= 2*(E*tn*4) + 2*(E*tn*4) = 16*E*tn bytes (weights + commit block are tiny).
    """
    cap = (_VMEM_BUDGET_BYTES // (16 * embed_dim)) // 128 * 128
    cap = max(128, min(cap, _MAX_TOKEN_TILE))
    if n_tokens <= cap:
        return n_tokens
    for t in range(cap, 127, -128):
        if n_tokens % t == 0:
            return t
    return 128  # n_tokens is asserted to be a multiple of 128 upstream


def prepare_lfq_params(w_in, b_in, w_out, b_out):
    """One-time layout prep, hoisted out of the per-call jit path.

    w_in  (E, CD) -> (CD, E)   project_in  weight, pre-transposed
    b_in  (CD,)   -> (CD, 1)   column bias
    w_out (CD, E) -> (E, CD)   project_out weight, pre-transposed
    b_out (E,)    -> (E, 1)    column bias
    """
    return (jnp.asarray(w_in).T,
            jnp.asarray(b_in).reshape(-1, 1),
            jnp.asarray(w_out).T,
            jnp.asarray(b_out).reshape(-1, 1))


def lfq_kernel(z_ref, w_in_t_ref, b_in_ref, w_out_t_ref, b_out_ref,
               zq_ref, commit_ref):
    """One (batch, token-parallel-split, token-tile) step of LFQ.

    z_ref      : (1, E, TN)      input slab, tokens on the lane axis
    w_in_t_ref : (CD, E)         project_in weight, pre-transposed (W^T)
    b_in_ref   : (CD, 1)         project_in bias as a column
    w_out_t_ref: (E, CD)         project_out weight, pre-transposed (W^T)
    b_out_ref  : (E, 1)          project_out bias as a column
    zq_ref     : (1, E, TN)      quantized + projected output slab
    commit_ref : (1, 1, CD, 128) lane-dense running sum of (z_proj - z_q)^2,
                                 same block across the inner token axis
                                 (resident accumulator keyed by (b, np)).
    """
    n = pl.program_id(2)

    z = z_ref[0]  # (E, TN)

    # project_in: W_in^T @ z + b_in  ->  (CD, TN), tokens stay on lanes.
    # Default (bf16 multi-pass) matmul precision matches the in-file reference;
    # set precision=HIGHEST here if bit-fidelity to a strict fp32 torch run
    # ever matters (K is only 16/32, the cost is negligible).
    z_proj = jnp.dot(w_in_t_ref[...], z, preferred_element_type=jnp.float32)
    z_proj = z_proj + b_in_ref[...]

    # Lookup-free quantization: strictly positive -> +1 else -1
    # (matches torch.where(z > 0, ones, -ones); straight-through fwd value).
    z_q = jnp.where(z_proj > 0, 1.0, -1.0).astype(jnp.float32)

    # Commit-loss running sum, folded into the kernel:
    # accumulate TN/128 aligned 128-lane slices of d*d into a fixed (CD, 128)
    # block that stays resident across the inner token axis. Pure VPU adds per
    # step; the tiny final reduce happens once in the wrapper.
    @pl.when(n == 0)
    def _():
        commit_ref[...] = jnp.zeros_like(commit_ref)

    d = z_proj - z_q
    dd = d * d
    tn = dd.shape[-1]
    acc = commit_ref[0, 0]                        # (CD, 128)
    for j in range(tn // 128):                    # static, lane-aligned slices
        acc = acc + dd[:, j * 128:(j + 1) * 128]
    commit_ref[0, 0] = acc

    # project_out: W_out^T @ z_q + b_out  ->  (E, TN)
    out = jnp.dot(w_out_t_ref[...], z_q, preferred_element_type=jnp.float32)
    out = out + b_out_ref[...]
    zq_ref[0] = out.astype(zq_ref.dtype)


@functools.partial(jax.jit,
                   static_argnames=("commitment_loss_weight", "tn", "np_split"))
def lfq_forward(z_nchw, w_in_t, b_in_col, w_out_t, b_out_col,
                commitment_loss_weight=0.25, tn=None, np_split=None):
    """LFQuantizer.forward (entropy_loss=False).

    Takes pre-transposed params from prepare_lfq_params.
    Returns (z_q [B, E, H, W], loss [B, 1, 1, 1], mean_commit_loss scalar).
    """
    B, E, H, W = z_nchw.shape
    CD = w_in_t.shape[0]
    N = H * W

    # Keep the token/lane axis strictly 128-aligned so every store is an
    # unmasked full-lane vst (no vst.msk partial stores).
    assert N % 128 == 0, "H*W must be a multiple of 128 for the lane-dense path"

    if tn is None:
        tn = _choose_token_tile(N, E)
    tn = min(tn, N)
    assert N % tn == 0 and tn % 128 == 0, "token tile must be lane aligned"

    num_tok_blocks = N // tn
    if np_split is None:
        # Only split tokens across cores when batch alone can't fill 2 TCs
        # (v7x megacore); no-op on single-TC v5e/v6e.
        np_split = 2 if (B % 2 == 1 and num_tok_blocks % 2 == 0) else 1
    assert num_tok_blocks % np_split == 0
    nt = num_tok_blocks // np_split

    # NCHW -> (B, E, N): pure reshape, no transpose / extra HBM pass.
    z = z_nchw.reshape(B, E, N)

    grid = (B, np_split, nt)

    zq_flat, commit_partial = pl.pallas_call(
        lfq_kernel,
        out_shape=(
            jax.ShapeDtypeStruct((B, E, N), z.dtype),
            jax.ShapeDtypeStruct((B, np_split, CD, 128), jnp.float32),
        ),
        grid_spec=pltpu.PrefetchScalarGridSpec(
            num_scalar_prefetch=0,
            grid=grid,
            in_specs=[
                pl.BlockSpec((1, E, tn), lambda b, p, n: (b, 0, p * nt + n)),
                pl.BlockSpec((CD, E), lambda b, p, n: (0, 0)),
                pl.BlockSpec((CD, 1), lambda b, p, n: (0, 0)),
                pl.BlockSpec((E, CD), lambda b, p, n: (0, 0)),
                pl.BlockSpec((E, 1), lambda b, p, n: (0, 0)),
            ],
            out_specs=(
                pl.BlockSpec((1, E, tn), lambda b, p, n: (b, 0, p * nt + n)),
                # Same block for every inner n -> resident accumulator; keyed
                # by (b, p) so parallel batch/token-split sharding is race-free.
                pl.BlockSpec((1, 1, CD, 128), lambda b, p, n: (b, p, 0, 0)),
            ),
        ),
        compiler_params=pltpu.CompilerParams(
            dimension_semantics=("parallel", "parallel", "arbitrary"),
            # Sized for v7x's smaller scoped budget; on v6e/v5e this could be
            # raised together with _VMEM_BUDGET_BYTES if E ever binds the tile.
            vmem_limit_bytes=32 << 20,
        ),
    )(z, w_in_t, b_in_col, w_out_t, b_out_col)

    # commit_loss = mean over [n, codebook(=1), codebook_dim]
    commit_loss = jnp.sum(commit_partial, axis=(1, 2, 3)) / jnp.float32(N * CD)
    loss = commitment_loss_weight * commit_loss

    z_q = zq_flat.reshape(B, E, H, W)   # pure reshape back to NCHW

    return (z_q,
            loss[:, None, None, None],
            commitment_loss_weight * jnp.mean(commit_loss))

# TODO(synk): entropy_loss=True branch (softmax over 2**codebook_dim codes,
# per-sample / codebook entropies) not implemented; default config uses False.


def _reference_forward(z_nchw, w_in, b_in, w_out, b_out, w_commit=0.25):
    """Pure-JAX reference mirroring the PyTorch forward (entropy_loss=False)."""
    B, D, H, W = z_nchw.shape
    z = jnp.transpose(z_nchw, (0, 2, 3, 1)).reshape(B, H * W, D)
    z_proj = z @ w_in + b_in            # project_in
    z_q = jnp.where(z_proj > 0, 1.0, -1.0)
    commit = jnp.mean((z_proj - z_q) ** 2, axis=(1, 2))  # mean over [n, c, d]
    out = z_q @ w_out + b_out           # project_out
    out = jnp.transpose(out.reshape(B, H, W, D), (0, 3, 1, 2))
    loss = w_commit * commit
    return out, loss[:, None, None, None], w_commit * jnp.mean(commit)


if __name__ == "__main__":
    key = jax.random.PRNGKey(0)
    B, E, H, W = 2, 32, 16, 16      # embed_dim = 32, N = 256 tokens
    CD = 16                         # codebook_dim = 16 (codebook_size = 2**16)

    k_z, k_wi, k_bi, k_wo, k_bo = jax.random.split(key, 5)
    z = jax.random.normal(k_z, (B, E, H, W), jnp.float32)

    # Deterministic Linear-style init (uniform +/- 1/sqrt(fan_in)).
    w_in = jax.random.uniform(k_wi, (E, CD), jnp.float32,
                              minval=-1.0, maxval=1.0) / jnp.sqrt(E)
    b_in = jax.random.uniform(k_bi, (CD,), jnp.float32,
                              minval=-1.0, maxval=1.0) / jnp.sqrt(E)
    w_out = jax.random.uniform(k_wo, (CD, E), jnp.float32,
                               minval=-1.0, maxval=1.0) / jnp.sqrt(CD)
    b_out = jax.random.uniform(k_bo, (E,), jnp.float32,
                               minval=-1.0, maxval=1.0) / jnp.sqrt(CD)

    # One-time layout prep (outside the jitted forward).
    params = prepare_lfq_params(w_in, b_in, w_out, b_out)

    z_q, loss, mean_commit = lfq_forward(z, *params)
    jax.block_until_ready((z_q, loss, mean_commit))

    zq_ref, loss_ref, mc_ref = _reference_forward(z, w_in, b_in, w_out, b_out)
    assert z_q.shape == (B, E, H, W)
    assert loss.shape == (B, 1, 1, 1)
    assert jnp.allclose(z_q, zq_ref, atol=1e-5, rtol=1e-5)
    assert jnp.allclose(loss, loss_ref, atol=1e-5, rtol=1e-5)
    assert jnp.allclose(mean_commit, mc_ref, atol=1e-5, rtol=1e-5)

    print("KERNEL_OK")
</pallas_src>

<mosaic_0001>
module attributes {stable_mosaic.version = 11 : i64} {
  func.func @lfq_kernel(%arg0: i32, %arg1: i32, %arg2: i32, %arg3: memref<1x32x256xf32, #tpu.memory_space<vmem>>, %arg4: memref<16x32xf32, #tpu.memory_space<vmem>>, %arg5: memref<16x1xf32, #tpu.memory_space<vmem>>, %arg6: memref<32x16xf32, #tpu.memory_space<vmem>>, %arg7: memref<32x1xf32, #tpu.memory_space<vmem>>, %arg8: memref<1x32x256xf32, #tpu.memory_space<vmem>>, %arg9: memref<1x1x16x128xf32, #tpu.memory_space<vmem>>) attributes {dimension_semantics = [#tpu.dimension_semantics<parallel>, #tpu.dimension_semantics<parallel>, #tpu.dimension_semantics<arbitrary>], iteration_bounds = array<i64: 2, 1, 1>, scalar_prefetch = 0 : i64, scratch_operands = 0 : i64, tpu.core_type = #tpu.core_type<tc>, window_params = [{transform_indices = @transform_0, window_bounds = array<i64: 1, 32, 256>}, {pipeline_mode = #tpu.pipeline_mode<synchronous>, transform_indices = @transform_1, window_bounds = array<i64: 16, 32>}, {pipeline_mode = #tpu.pipeline_mode<synchronous>, transform_indices = @transform_2, window_bounds = array<i64: 16, 1>}, {pipeline_mode = #tpu.pipeline_mode<synchronous>, transform_indices = @transform_3, window_bounds = array<i64: 32, 16>}, {pipeline_mode = #tpu.pipeline_mode<synchronous>, transform_indices = @transform_4, window_bounds = array<i64: 32, 1>}, {transform_indices = @transform_5, window_bounds = array<i64: 1, 32, 256>}, {transform_indices = @transform_6, window_bounds = array<i64: 1, 1, 16, 128>}]} {
    %c0 = arith.constant 0 : index
    %c0_0 = arith.constant 0 : index
    %c0_1 = arith.constant 0 : index
    %0 = vector.load %arg3[%c0, %c0_0, %c0_1] : memref<1x32x256xf32, #tpu.memory_space<vmem>>, vector<1x32x256xf32>
    %1 = vector.shape_cast %0 : vector<1x32x256xf32> to vector<32x256xf32>
    %c0_2 = arith.constant 0 : index
    %c0_3 = arith.constant 0 : index
    %2 = vector.load %arg4[%c0_2, %c0_3] : memref<16x32xf32, #tpu.memory_space<vmem>>, vector<16x32xf32>
    %cst = arith.constant dense<0.000000e+00> : vector<16x256xf32>
    %3 = tpu.matmul %2, %1, %cst {dimension_numbers = #tpu.dot_dimension_numbers<[1], [0], [0], [1], [0, 0, 1, 1], [], []>} : vector<16x32xf32>, vector<32x256xf32>, vector<16x256xf32> -> vector<16x256xf32>
    %c0_4 = arith.constant 0 : index
    %c0_5 = arith.constant 0 : index
    %4 = vector.load %arg5[%c0_4, %c0_5] : memref<16x1xf32, #tpu.memory_space<vmem>>, vector<16x1xf32>
    %5 = vector.broadcast %4 : vector<16x1xf32> to vector<16x256xf32>
    %6 = arith.addf %3, %5 : vector<16x256xf32>
    %cst_6 = arith.constant 0.000000e+00 : f32
    %7 = vector.broadcast %cst_6 : f32 to vector<16x256xf32>
    %8 = arith.cmpf ogt, %6, %7 : vector<16x256xf32>
    %cst_7 = arith.constant 1.000000e+00 : f32
    %cst_8 = arith.constant -1.000000e+00 : f32
    %9 = vector.broadcast %cst_7 : f32 to vector<16x256xf32>
    %10 = vector.broadcast %cst_8 : f32 to vector<16x256xf32>
    %11 = arith.select %8, %9, %10 : vector<16x256xi1>, vector<16x256xf32>
    %c0_i32 = arith.constant 0 : i32
    %12 = arith.cmpi eq, %arg2, %c0_i32 : i32
    %13 = arith.extui %12 : i1 to i32
    %c0_i32_9 = arith.constant 0 : i32
    %14 = arith.cmpi ne, %13, %c0_i32_9 : i32
    scf.if %14 {
      %cst_26 = arith.constant 0.000000e+00 : f32
      %34 = vector.broadcast %cst_26 : f32 to vector<1x1x16x128xf32>
      %c0_27 = arith.constant 0 : index
      %c0_28 = arith.constant 0 : index
      %c0_29 = arith.constant 0 : index
      %c0_30 = arith.constant 0 : index
      %35 = vector.load %arg9[%c0_27, %c0_28, %c0_29, %c0_30] : memref<1x1x16x128xf32, #tpu.memory_space<vmem>>, vector<1x1x16x128xf32>
      tpu.vector_store %arg9[%c0_27, %c0_28, %c0_29, %c0_30], %34 {strides = array<i32>} : memref<1x1x16x128xf32, #tpu.memory_space<vmem>>, vector<1x1x16x128xf32>,
    } else {
    }
    %15 = arith.subf %6, %11 : vector<16x256xf32>
    %16 = arith.mulf %15, %15 : vector<16x256xf32>
    %c0_10 = arith.constant 0 : index
    %c0_11 = arith.constant 0 : index
    %c0_12 = arith.constant 0 : index
    %c0_13 = arith.constant 0 : index
    %17 = vector.load %arg9[%c0_10, %c0_11, %c0_12, %c0_13] : memref<1x1x16x128xf32, #tpu.memory_space<vmem>>, vector<1x1x16x128xf32>
    %18 = vector.shape_cast %17 : vector<1x1x16x128xf32> to vector<16x128xf32>
    %19 = vector.extract_strided_slice %16 {offsets = [0, 0], sizes = [16, 128], strides = [1, 1]} : vector<16x256xf32> to vector<16x128xf32>
    %20 = arith.addf %18, %19 : vector<16x128xf32>
    %21 = vector.extract_strided_slice %16 {offsets = [0, 128], sizes = [16, 128], strides = [1, 1]} : vector<16x256xf32> to vector<16x128xf32>
    %22 = arith.addf %20, %21 : vector<16x128xf32>
    %c0_14 = arith.constant 0 : index
    %c0_15 = arith.constant 0 : index
    %c0_16 = arith.constant 0 : index
    %c0_17 = arith.constant 0 : index
    %23 = vector.load %arg9[%c0_14, %c0_15, %c0_16, %c0_17] : memref<1x1x16x128xf32, #tpu.memory_space<vmem>>, vector<1x1x16x128xf32>
    %24 = vector.shape_cast %23 : vector<1x1x16x128xf32> to vector<16x128xf32>
    %25 = vector.shape_cast %22 : vector<16x128xf32> to vector<1x1x16x128xf32>
    tpu.vector_store %arg9[%c0_14, %c0_15, %c0_16, %c0_17], %25 {strides = array<i32>} : memref<1x1x16x128xf32, #tpu.memory_space<vmem>>, vector<1x1x16x128xf32>,
    %c0_18 = arith.constant 0 : index
    %c0_19 = arith.constant 0 : index
    %26 = vector.load %arg6[%c0_18, %c0_19] : memref<32x16xf32, #tpu.memory_space<vmem>>, vector<32x16xf32>
    %cst_20 = arith.constant dense<0.000000e+00> : vector<32x256xf32>
    %27 = tpu.matmul %26, %11, %cst_20 {dimension_numbers = #tpu.dot_dimension_numbers<[1], [0], [0], [1], [0, 0, 1, 1], [], []>} : vector<32x16xf32>, vector<16x256xf32>, vector<32x256xf32> -> vector<32x256xf32>
    %c0_21 = arith.constant 0 : index
    %c0_22 = arith.constant 0 : index
    %28 = vector.load %arg7[%c0_21, %c0_22] : memref<32x1xf32, #tpu.memory_space<vmem>>, vector<32x1xf32>
    %29 = vector.broadcast %28 : vector<32x1xf32> to vector<32x256xf32>
    %30 = arith.addf %27, %29 : vector<32x256xf32>
    %c0_23 = arith.constant 0 : index
    %c0_24 = arith.constant 0 : index
    %c0_25 = arith.constant 0 : index
    %31 = vector.load %arg8[%c0_23, %c0_24, %c0_25] : memref<1x32x256xf32, #tpu.memory_space<vmem>>, vector<1x32x256xf32>
    %32 = vector.shape_cast %31 : vector<1x32x256xf32> to vector<32x256xf32>
    %33 = vector.shape_cast %30 : vector<32x256xf32> to vector<1x32x256xf32>
    tpu.vector_store %arg8[%c0_23, %c0_24, %c0_25], %33 {strides = array<i32>} : memref<1x32x256xf32, #tpu.memory_space<vmem>>, vector<1x32x256xf32>,
    return
  }
  func.func @transform_0(%arg0: i32, %arg1: i32, %arg2: i32) -> (i32, i32, i32) {
    %c1_i32 = arith.constant 1 : i32
    %0 = arith.muli %arg1, %c1_i32 : i32
    %1 = arith.addi %0, %arg2 : i32
    %c0_i32 = arith.constant 0 : i32
    %c0_i32_0 = arith.constant 0 : i32
    return %arg0, %c0_i32, %1 : i32, i32, i32
  }
  func.func @transform_1(%arg0: i32, %arg1: i32, %arg2: i32) -> (i32, i32) {
    %c0_i32 = arith.constant 0 : i32
    %c0_i32_0 = arith.constant 0 : i32
    %c0_i32_1 = arith.constant 0 : i32
    return %c0_i32, %c0_i32_0 : i32, i32
  }
  func.func @transform_2(%arg0: i32, %arg1: i32, %arg2: i32) -> (i32, i32) {
    %c0_i32 = arith.constant 0 : i32
    %c0_i32_0 = arith.constant 0 : i32
    %c0_i32_1 = arith.constant 0 : i32
    return %c0_i32, %c0_i32_0 : i32, i32
  }
  func.func @transform_3(%arg0: i32, %arg1: i32, %arg2: i32) -> (i32, i32) {
    %c0_i32 = arith.constant 0 : i32
    %c0_i32_0 = arith.constant 0 : i32
    %c0_i32_1 = arith.constant 0 : i32
    return %c0_i32, %c0_i32_0 : i32, i32
  }
  func.func @transform_4(%arg0: i32, %arg1: i32, %arg2: i32) -> (i32, i32) {
    %c0_i32 = arith.constant 0 : i32
    %c0_i32_0 = arith.constant 0 : i32
    %c0_i32_1 = arith.constant 0 : i32
    return %c0_i32, %c0_i32_0 : i32, i32
  }
  func.func @transform_5(%arg0: i32, %arg1: i32, %arg2: i32) -> (i32, i32, i32) {
    %c1_i32 = arith.constant 1 : i32
    %0 = arith.muli %arg1, %c1_i32 : i32
    %1 = arith.addi %0, %arg2 : i32
    %c0_i32 = arith.constant 0 : i32
    %c0_i32_0 = arith.constant 0 : i32
    return %arg0, %c0_i32, %1 : i32, i32, i32
  }
  func.func @transform_6(%arg0: i32, %arg1: i32, %arg2: i32) -> (i32, i32, i32, i32) {
    %c0_i32 = arith.constant 0 : i32
    %c0_i32_0 = arith.constant 0 : i32
    %c0_i32_1 = arith.constant 0 : i32
    return %arg0, %arg1, %c0_i32, %c0_i32_0 : i32, i32, i32, i32
  }
}

</mosaic_0001>

<llo_original>
// kernel: lfq_forward.1
$region0: #{lfq_forward.1}
  #allocation0 [shape = 'u32[]', space=smem, size = 0x4, offset = 0x4, fixed_abs, tag = 'smem constant byte address 0x4 - core index']
  #allocation1 [shape = 'u32[144,128]{1,0:T(1,128)}', space=vmem, size = 0x12000, scoped, tag = 'internal scratch']
  %s0 = inlined_call_operand.vmem [shape: f32[2,32,256], index: 0, kind: input, shape index: {}]
  %s1 = inlined_call_operand.vmem [shape: f32[16,32], index: 1, kind: input, shape index: {}]
  %s2 = inlined_call_operand.vmem [shape: f32[16,1], index: 2, kind: input, shape index: {}]
  %s3 = inlined_call_operand.vmem [shape: f32[32,16], index: 3, kind: input, shape index: {}]
  %s4 = inlined_call_operand.vmem [shape: f32[32,1], index: 4, kind: input, shape index: {}]
  %s5 = inlined_call_operand.vmem [shape: f32[2,32,256], index: 5, kind: output, shape index: {0}]
  %s6 = inlined_call_operand.vmem [shape: f32[2,1,16,128], index: 6, kind: output, shape index: {1}]
  %7 = xla_tuple %s5, %s6
  %s8 = sld [smem:[#allocation0]]
  $region65: #{lfq_forward.1} parent=0
    _
  %s10 = ssub.s32 1, %s8
  %s11 = scalar_select 0, %s10, %s8
  loop: start=0, step=1, limit=4
  $region2: #{lfq_forward.1} parent=0 // loop_pre_header
    _
  $region3: #{lfq_forward.1} parent=0 // loop_header
    %s13 = sphi 0, %s17
    %p14 = scmp.ge.s32.totalorder %s13, 4
    %s20 = sphi 0, %s39
    %s21 = sphi 0, %s35
    %s22 = sphi 0, %s31
    %s23 = sphi 0, %s20
    %s24 = sphi 0, %s21
    %s25 = sphi 0, %s22
    %s26 = sphi 0, %s23
    %s27 = sphi 0, %s24
    %s28 = sphi 0, %s25
    %s46 = sphi 0, %s48
    %s49 = sphi 0, %s46
    %s50 = sphi 0, %s49
    %s66 = sphi 0, %s50
    %s70 = sphi 0, %s70
    %s72 = sphi 0, %s70
    %s73 = sphi 0, %s72
    %s87 = sphi 0, %s73
    %s91 = sphi 0, %s91
    %s93 = sphi 0, %s91
    %s94 = sphi 0, %s93
    %s108 = sphi 0, %s94
    %s112 = sphi 0, %s112
    %s114 = sphi 0, %s112
    %s115 = sphi 0, %s114
    %s129 = sphi 0, %s115
    %s133 = sphi 0, %s133
    %s135 = sphi 0, %s133
    %s136 = sphi 0, %s135
    %s150 = sphi 0, %s136
    %s160 = sphi 0, %s162
    %s163 = sphi 0, %s160
    %s164 = sphi 0, %s163
    %s180 = sphi 0, %s164
    %s188 = sphi 0, %s190
    %s191 = sphi 0, %s188
    %s192 = sphi 0, %s191
    %s208 = sphi 0, %s192
  $region4: #{lfq_forward.1} parent=0 // loop_header_branch
    %16 = sbr.rel (%p14) target = $region8
  $region5: #{lfq_forward.1} parent=0 // loop_body
    %s18 = ssub.s32 %s13, 1
    %s19 = ssub.s32 %s13, 2
    %s29 = sadd.s32 1, %s22
    %p30 = scmp.ge.s32.totalorder %s29, 1
    %s31 = scalar_select %p30, 0, %s29
    %s32 = sadd.s32 1, %s21
    %s33 = scalar_select %p30, %s32, %s21
    %p34 = scmp.ge.s32.totalorder %s33, 1
    %s35 = scalar_select %p34, 0, %s33
    %s36 = sadd.s32 1, %s20
    %s37 = scalar_select %p34, %s36, %s20
    %p38 = scmp.ge.s32.totalorder %s37, 2
    %s39 = scalar_select %p38, 0, %s37
    %s40 = sadd.s32 %s21, %s22
    %s41 = sadd.s32 %s35, %s31
    %s42 = ssub.s32 %s20, %s39
    %s43 = ssub.s32 %s40, %s41
    %s44 = sor.u32 %s42, %s43
    %p45 = scmp.eq.s32.totalorder %s44, 0
    %s47 = sadd.s32 %s46, 1
    %s48 = scalar_select %p45, %s46, %s47
    %p51 = pneg %p45
    %p52 = scmp.eq.s32.totalorder %s13, 1
    %p53 = por %p51, %p52
    %p54 = scmp.ne.s32.totalorder %s46, %s49
    %p55 = scmp.eq.s32.totalorder %s13, 0
    %p56 = por %p54, %p55
    %p57 = scmp.ne.s32.totalorder %s46, %s49
    %p58 = scmp.eq.s32.totalorder %s18, 1
    %p59 = por %p57, %p58
    %p60 = scmp.ne.s32.totalorder %s49, %s50
    %p61 = scmp.eq.s32.totalorder %s18, 0
    %p62 = por %p60, %p61
    %p63 = scmp.ne.s32.totalorder %s49, %s50
    %p64 = scmp.eq.s32.totalorder %s19, 1
    %p65 = por %p63, %p64
    %p67 = scmp.ne.s32.totalorder %s50, %s66
    %p68 = scmp.eq.s32.totalorder %s19, 0
    %p69 = por %p67, %p68
    %s71 = sadd.s32 %s70, 1
    %p74 = scmp.eq.s32.totalorder %s13, 1
    %p75 = scmp.ne.s32.totalorder %s70, %s72
    %p76 = scmp.eq.s32.totalorder %s13, 0
    %p77 = por %p75, %p76
    %p78 = scmp.ne.s32.totalorder %s70, %s72
    %p79 = scmp.eq.s32.totalorder %s18, 1
    %p80 = por %p78, %p79
    %p81 = scmp.ne.s32.totalorder %s72, %s73
    %p82 = scmp.eq.s32.totalorder %s18, 0
    %p83 = por %p81, %p82
    %p84 = scmp.ne.s32.totalorder %s72, %s73
    %p85 = scmp.eq.s32.totalorder %s19, 1
    %p86 = por %p84, %p85
    %p88 = scmp.ne.s32.totalorder %s73, %s87
    %p89 = scmp.eq.s32.totalorder %s19, 0
    %p90 = por %p88, %p89
    %s92 = sadd.s32 %s91, 1
    %p95 = scmp.eq.s32.totalorder %s13, 1
    %p96 = scmp.ne.s32.totalorder %s91, %s93
    %p97 = scmp.eq.s32.totalorder %s13, 0
    %p98 = por %p96, %p97
    %p99 = scmp.ne.s32.totalorder %s91, %s93
    %p100 = scmp.eq.s32.totalorder %s18, 1
    %p101 = por %p99, %p100
    %p102 = scmp.ne.s32.totalorder %s93, %s94
    %p103 = scmp.eq.s32.totalorder %s18, 0
    %p104 = por %p102, %p103
    %p105 = scmp.ne.s32.totalorder %s93, %s94
    %p106 = scmp.eq.s32.totalorder %s19, 1
    %p107 = por %p105, %p106
    %p109 = scmp.ne.s32.totalorder %s94, %s108
    %p110 = scmp.eq.s32.totalorder %s19, 0
    %p111 = por %p109, %p110
    %s113 = sadd.s32 %s112, 1
    %p116 = scmp.eq.s32.totalorder %s13, 1
    %p117 = scmp.ne.s32.totalorder %s112, %s114
    %p118 = scmp.eq.s32.totalorder %s13, 0
    %p119 = por %p117, %p118
    %p120 = scmp.ne.s32.totalorder %s112, %s114
    %p121 = scmp.eq.s32.totalorder %s18, 1
    %p122 = por %p120, %p121
    %p123 = scmp.ne.s32.totalorder %s114, %s115
    %p124 = scmp.eq.s32.totalorder %s18, 0
    %p125 = por %p123, %p124
    %p126 = scmp.ne.s32.totalorder %s114, %s115
    %p127 = scmp.eq.s32.totalorder %s19, 1
    %p128 = por %p126, %p127
    %p130 = scmp.ne.s32.totalorder %s115, %s129
    %p131 = scmp.eq.s32.totalorder %s19, 0
    %p132 = por %p130, %p131
    %s134 = sadd.s32 %s133, 1
    %p137 = scmp.eq.s32.totalorder %s13, 1
    %p138 = scmp.ne.s32.totalorder %s133, %s135
    %p139 = scmp.eq.s32.totalorder %s13, 0
    %p140 = por %p138, %p139
    %p141 = scmp.ne.s32.totalorder %s133, %s135
    %p142 = scmp.eq.s32.totalorder %s18, 1
    %p143 = por %p141, %p142
    %p144 = scmp.ne.s32.totalorder %s135, %s136
    %p145 = scmp.eq.s32.totalorder %s18, 0
    %p146 = por %p144, %p145
    %p147 = scmp.ne.s32.totalorder %s135, %s136
    %p148 = scmp.eq.s32.totalorder %s19, 1
    %p149 = por %p147, %p148
    %p151 = scmp.ne.s32.totalorder %s136, %s150
    %p152 = scmp.eq.s32.totalorder %s19, 0
    %p153 = por %p151, %p152
    %s154 = sadd.s32 %s21, %s22
    %s155 = sadd.s32 %s35, %s31
    %s156 = ssub.s32 %s20, %s39
    %s157 = ssub.s32 %s154, %s155
    %s158 = sor.u32 %s156, %s157
    %p159 = scmp.eq.s32.totalorder %s158, 0
    %s161 = sadd.s32 %s160, 1
    %s162 = scalar_select %p159, %s160, %s161
    %p165 = pneg %p159
    %p166 = scmp.eq.s32.totalorder %s13, 1
    %p167 = por %p165, %p166
    %p168 = scmp.ne.s32.totalorder %s160, %s163
    %p169 = scmp.eq.s32.totalorder %s13, 0
    %p170 = por %p168, %p169
    %p171 = scmp.ne.s32.totalorder %s160, %s163
    %p172 = scmp.eq.s32.totalorder %s18, 1
    %p173 = por %p171, %p172
    %p174 = scmp.ne.s32.totalorder %s163, %s164
    %p175 = scmp.eq.s32.totalorder %s18, 0
    %p176 = por %p174, %p175
    %p177 = scmp.ne.s32.totalorder %s163, %s164
    %p178 = scmp.eq.s32.totalorder %s19, 1
    %p179 = por %p177, %p178
    %p181 = scmp.ne.s32.totalorder %s164, %s180
    %p182 = scmp.eq.s32.totalorder %s19, 0
    %p183 = por %p181, %p182
    %s184 = ssub.s32 %s20, %s39
    %s185 = ssub.s32 %s21, %s35
    %s186 = sor.u32 %s184, %s185
    %p187 = scmp.eq.s32.totalorder %s186, 0
    %s189 = sadd.s32 %s188, 1
    %s190 = scalar_select %p187, %s188, %s189
    %p193 = pneg %p187
    %p194 = scmp.eq.s32.totalorder %s13, 1
    %p195 = por %p193, %p194
    %p196 = scmp.ne.s32.totalorder %s188, %s191
    %p197 = scmp.eq.s32.totalorder %s13, 0
    %p198 = por %p196, %p197
    %p199 = scmp.ne.s32.totalorder %s188, %s191
    %p200 = scmp.eq.s32.totalorder %s18, 1
    %p201 = por %p199, %p200
    %p202 = scmp.ne.s32.totalorder %s191, %s192
    %p203 = scmp.eq.s32.totalorder %s18, 0
    %p204 = por %p202, %p203
    %p205 = scmp.ne.s32.totalorder %s191, %s192
    %p206 = scmp.eq.s32.totalorder %s19, 1
    %p207 = por %p205, %p206
    %p209 = scmp.ne.s32.totalorder %s192, %s208
    %p210 = scmp.eq.s32.totalorder %s19, 0
    %p211 = por %p209, %p210
    %p212 = scmp.le.s32.totalorder 1, %s13
    %p213 = scmp.lt.s32.totalorder %s13, 3
    %p214 = pnand %p212, %p213
    %p215 = pneg %p214
    // Predicated region
    $region9: #{lfq_forward.1} parent=5 // pred_check
      _
    $region10: #{lfq_forward.1} parent=5 // pred_check_branch
      %217 = sbr.rel (%p214) target = $region12
    $region11: #{lfq_forward.1} parent=5 // pred_region
      %s218 = ssub.s32 %s13, 1
      // Predicated region
      $region13: #{lfq_forward.1} parent=11 // pred_check
        %p219 = pneg %p83
      $region14: #{lfq_forward.1} parent=11 // pred_check_branch
        %221 = sbr.rel (%p219) target = $region16
      $region15: #{lfq_forward.1} parent=11 // pred_region
        _
      $region16: #{lfq_forward.1} parent=11 // pred_fallthru
        _
      // Predicated region
      $region17: #{lfq_forward.1} parent=11 // pred_check
        %p222 = pneg %p104
      $region18: #{lfq_forward.1} parent=11 // pred_check_branch
        %224 = sbr.rel (%p222) target = $region20
      $region19: #{lfq_forward.1} parent=11 // pred_region
        _
      $region20: #{lfq_forward.1} parent=11 // pred_fallthru
        _
      // Predicated region
      $region21: #{lfq_forward.1} parent=11 // pred_check
        %p225 = pneg %p125
      $region22: #{lfq_forward.1} parent=11 // pred_check_branch
        %227 = sbr.rel (%p225) target = $region24
      $region23: #{lfq_forward.1} parent=11 // pred_region
        _
      $region24: #{lfq_forward.1} parent=11 // pred_fallthru
        _
      // Predicated region
      $region25: #{lfq_forward.1} parent=11 // pred_check
        %p228 = pneg %p146
      $region26: #{lfq_forward.1} parent=11 // pred_check_branch
        %230 = sbr.rel (%p228) target = $region28
      $region27: #{lfq_forward.1} parent=11 // pred_region
        _
      $region28: #{lfq_forward.1} parent=11 // pred_fallthru
        _
    $region12: #{lfq_forward.1} parent=5 // pred_fallthru
      _
    %p231 = scmp.lt.s32.totalorder %s13, 2
    // Predicated region
    $region29: #{lfq_forward.1} parent=5 // pred_check
      %p232 = pneg %p231
    $region30: #{lfq_forward.1} parent=5 // pred_check_branch
      %234 = sbr.rel (%p232) target = $region32
    $region31: #{lfq_forward.1} parent=5 // pred_region
      // Predicated region
      $region33: #{lfq_forward.1} parent=31 // pred_check
        %p235 = pneg %p56
      $region34: #{lfq_forward.1} parent=31 // pred_check_branch
        %237 = sbr.rel (%p235) target = $region36
      $region35: #{lfq_forward.1} parent=31 // pred_region
        %s238 = sadd.s32 %s21, %s22
        %s239 = smul.u32 2, %s238
        %p240 = scmp.lt.s32.totalorder %s20, 1
        %s241 = scalar_select %p240, %s20, 1
        %p242 = scmp.lt.s32.totalorder %s239, 1
        %s243 = scalar_select %p242, %s239, 1
        %s244 = smul.addr %s241, 8
        %s245 = sadd.s32 %s243, %s244
        %s246 = smul.addr %s245, 8
        %s247 = scalar_lea.vmem %s0, %s246
        %s248 = sadd.s32 %s21, %s22
        %s249 = smul.u32 2, %s248
      $region36: #{lfq_forward.1} parent=31 // pred_fallthru
        _
    $region32: #{lfq_forward.1} parent=5 // pred_fallthru
      _
    %p250 = scmp.le.s32.totalorder 1, %s13
    %p251 = scmp.lt.s32.totalorder %s13, 3
    %p252 = pnand %p250, %p251
    %p253 = pneg %p252
    // Predicated region
    $region37: #{lfq_forward.1} parent=5 // pred_check
      _
    $region38: #{lfq_forward.1} parent=5 // pred_check_branch
      %255 = sbr.rel (%p252) target = $region40
    $region39: #{lfq_forward.1} parent=5 // pred_region
      %s256 = ssub.s32 %s13, 1
      %s257 = sadd.s32 %s24, %s25
      %s258 = smul.u32 2, %s257
      %p259 = scmp.lt.s32.totalorder %s23, 1
      %s260 = scalar_select %p259, %s23, 1
      %p261 = scmp.lt.s32.totalorder %s258, 1
      %s262 = scalar_select %p261, %s258, 1
      %s263 = smul.addr %s260, 8
      %s264 = sadd.s32 %s262, %s263
      %s265 = smul.addr %s264, 8
      %s266 = scalar_lea.vmem %s0, %s265
      %p267 = pneg %p62
      %p268 = pneg %p59
      %p269 = pneg %p83
      %p270 = pneg %p80
      %p271 = pneg %p104
      %p272 = pneg %p101
      %p273 = pneg %p125
      %p274 = pneg %p122
      %p275 = pneg %p146
      %p276 = pneg %p143
      %p277 = pneg %p176
      %p278 = pneg %p173
      %s279 = sadd.s32 %s24, %s25
      %s280 = smul.u32 2, %s279
      %p281 = scmp.lt.s32.totalorder %s23, 1
      %s282 = scalar_select %p281, %s23, 1
      %p283 = scmp.lt.s32.totalorder %s280, 1
      %s284 = scalar_select %p283, %s280, 1
      %s285 = smul.addr %s282, 8
      %s286 = sadd.s32 %s284, %s285
      %s287 = smul.addr %s286, 8
      %s288 = scalar_lea.vmem %s5, %s287
      %p289 = pneg %p204
      %p290 = pneg %p201
      %p291 = scmp.lt.s32.totalorder %s23, 1
      %s292 = scalar_select %p291, %s23, 1
      %p293 = scmp.lt.s32.totalorder %s24, 0
      %s294 = scalar_select %p293, %s24, 0
      %s295 = smul.addr %s294, 2
      %s296 = smul.addr %s292, 2
      %s297 = sadd.s32 %s295, %s296
      %s298 = smul.addr %s297, 8
      %s299 = scalar_lea.vmem %s6, %s298
      %s300 = sadd.s32 %s24, %s25
      %s301 = smul.u32 2, %s300
      %p302 = scmp.lt.s32.totalorder %s23, 1
      %s303 = scalar_select %p302, %s23, 1
      %p304 = scmp.lt.s32.totalorder %s301, 1
      %s305 = scalar_select %p304, %s301, 1
      %s306 = smul.addr %s303, 8
      %s307 = sadd.s32 %s305, %s306
      %s308 = smul.addr %s307, 8
      %s309 = scalar_lea.vmem %s0, %s308
      %s310 = sadd.s32 %s24, %s25
      %s311 = smul.u32 2, %s310
      %s312 = sadd.s32 %s24, %s25
      %s313 = smul.u32 2, %s312
      %p314 = scmp.lt.s32.totalorder %s23, 1
      %s315 = scalar_select %p314, %s23, 1
      %p316 = scmp.lt.s32.totalorder %s313, 1
      %s317 = scalar_select %p316, %s313, 1
      %s318 = smul.addr %s315, 8
      %s319 = sadd.s32 %s317, %s318
      %s320 = smul.addr %s319, 8
      %s321 = scalar_lea.vmem %s5, %s320
      %s322 = sadd.s32 %s24, %s25
      %s323 = smul.u32 2, %s322
      %p324 = scmp.lt.s32.totalorder %s23, 1
      %s325 = scalar_select %p324, %s23, 1
      %p326 = scmp.lt.s32.totalorder %s24, 0
      %s327 = scalar_select %p326, %s24, 0
      %s328 = smul.addr %s327, 2
      %s329 = smul.addr %s325, 2
      %s330 = sadd.s32 %s328, %s329
      %s331 = smul.addr %s330, 8
      %s332 = scalar_lea.vmem %s6, %s331
      %v333 = vld [vmem:[%s309] sm:$0xff]
      %v334 = vld [vmem:[%s309 + $0x8] sm:$0xff]
      %v335 = vld [vmem:[%s309 + $0x10] sm:$0xff]
      %v336 = vld [vmem:[%s309 + $0x18] sm:$0xff]
      %v337 = vld [vmem:[%s309 + $0x20] sm:$0xff]
      %v338 = vld [vmem:[%s309 + $0x28] sm:$0xff]
      %v339 = vld [vmem:[%s309 + $0x30] sm:$0xff]
      %v340 = vld [vmem:[%s309 + $0x38] sm:$0xff]
      %v341 = vld [vmem:[%s1] sm:$0xff]
      %v342 = vld [vmem:[%s1 + $0x8] sm:$0xff]
      %v343 = vld [vmem:[%s2] sm:$0xff]
      %v344 = vld [vmem:[%s2 + $0x8] sm:$0xff]
      %346 = vset.pattern.permute.xlu0 0
      %347 = vperm.xlu0 %346, %v343
      %v348 = vpop.permute.xlu0 %347
      %351 = vset.pattern.permute.xlu0 0
      %352 = vperm.xlu0 %351, %v344
      %v353 = vpop.permute.xlu0 %352
      %vm355 = vcmask 261120
      %v357 = vsel %vm355, %v341, 0
      %v360 = vsel %vm355, %v342, 0
      %362 = vmatprep.subr.mxu0 %v334
      %363 = vmatpush1.msra.mxu0 %v333
      %364 = vmatprep.subr.mxu0 %v336
      %365 = vmatpush1.msra.mxu0 %v335
      %366 = vmatprep.subr.mxu0 %v338
      %367 = vmatpush1.msra.mxu0 %v337
      %368 = vmatprep.subr.mxu0 %v340
      %369 = vmatpush1.msra.mxu0 %v339
      %370 = vmatprep.subr.mxu0 0.0
      %371 = vmatpush1.msra.mxu0 0.0
      %372 = vmatprep.subr.mxu0 0.0
      %373 = vmatpush1.msra.mxu0 0.0
      %374 = vmatprep.subr.mxu0 0.0
      %375 = vmatpush1.msra.mxu0 0.0
      %376 = vmatprep.subr.mxu0 0.0
      %377 = vmatpush1.msra.mxu0 0.0
      %378 = vmatprep.subr.mxu0 0.0
      %379 = vmatpush1.msra.mxu0 0.0
      %380 = vmatprep.subr.mxu0 0.0
      %381 = vmatpush1.msra.mxu0 0.0
      %382 = vmatprep.subr.mxu0 0.0
      %383 = vmatpush1.msra.mxu0 0.0
      %384 = vmatprep.subr.mxu0 0.0
      %385 = vmatpush1.msra.mxu0 0.0
      %386 = vmatprep.subr.mxu0 0.0
      %387 = vmatpush1.msra.mxu0 0.0
      %388 = vmatprep.subr.mxu0 0.0
      %389 = vmatpush1.msra.mxu0 0.0
      %390 = vmatprep.subr.mxu0 0.0
      %391 = vmatpush1.msra.mxu0 0.0
      %392 = vmatprep.subr.mxu0 0.0
      %393 = vmatpush1.msra.mxu0 0.0
      %394 = vmatprep.subr.mxu0 0.0
      %395 = vmatpush1.msra.mxu0 0.0
      %396 = vmatprep.subr.mxu0 0.0
      %397 = vmatpush1.msra.mxu0 0.0
      %398 = vmatprep.subr.mxu0 0.0
      %399 = vmatpush1.msra.mxu0 0.0
      %400 = vmatprep.subr.mxu0 0.0
      %401 = vmatpush1.msra.mxu0 0.0
      %402 = vmatprep.subr.mxu0 0.0
      %403 = vmatpush1.msra.mxu0 0.0
      %404 = vmatprep.subr.mxu0 0.0
      %405 = vmatpush1.msra.mxu0 0.0
      %406 = vmatprep.subr.mxu0 0.0
      %407 = vmatpush1.msra.mxu0 0.0
      %408 = vmatprep.subr.mxu0 0.0
      %409 = vmatpush1.msra.mxu0 0.0
      %410 = vmatprep.subr.mxu0 0.0
      %411 = vmatpush1.msra.mxu0 0.0
      %412 = vmatprep.subr.mxu0 0.0
      %413 = vmatpush1.msra.mxu0 0.0
      %414 = vmatprep.subr.mxu0 0.0
      %415 = vmatpush1.msra.mxu0 0.0
      %416 = vmatprep.subr.mxu0 0.0
      %417 = vmatpush1.msra.mxu0 0.0
      %418 = vmatprep.subr.mxu0 0.0
      %419 = vmatpush1.msra.mxu0 0.0
      %420 = vmatprep.subr.mxu0 0.0
      %421 = vmatpush1.msra.mxu0 0.0
      %422 = vmatprep.subr.mxu0 0.0
      %423 = vmatpush1.msra.mxu0 0.0
      %424 = vmatprep.subr.mxu0 0.0
      %425 = vmatpush1.msra.mxu0 0.0
      %426 = vmatprep.mubr.f32.mxu0 0.0
      %427 = vmatmul.mubr.f32.gmra.mrb[0].mxu0 %v357
      %v428 = vpop.f32.mrb[0].mxu0
      %v429 = vadd.f32 %v348, %v428
      %v430 = vpop.f32.mrb[0].mxu0
      %v431 = vadd.f32 %v348, %v430
      %432 = vmatprep.mubr.f32.mxu0 0.0
      %433 = vmatmul.mubr.f32.gmra.mrb[0].mxu0 %v360
      %v434 = vpop.f32.mrb[0].mxu0
      %v435 = vadd.f32 %v353, %v434
      %v436 = vpop.f32.mrb[0].mxu0
      %v437 = vadd.f32 %v353, %v436
      %438 = vdwg.mxu0
      %vm439 = vcmp.gt.f32.partialorder %v429, 0.0
      %vm440 = vcmp.gt.f32.partialorder %v431, 0.0
      %vm441 = vcmp.gt.f32.partialorder %v435, 0.0
      %vm442 = vcmp.gt.f32.partialorder %v437, 0.0
      %v443 = vsel %vm439, 1.0, -1.0
      %v444 = vsel %vm440, 1.0, -1.0
      %v445 = vsel %vm441, 1.0, -1.0
      %v446 = vsel %vm442, 1.0, -1.0
      %p447 = scmp.eq.s32.totalorder %s25, 0
      // Predicated region
      $region41: #{lfq_forward.1} parent=39 // pred_check
        %p448 = pneg %p447
      $region42: #{lfq_forward.1} parent=39 // pred_check_branch
        %450 = sbr.rel (%p448) target = $region44
      $region43: #{lfq_forward.1} parent=39 // pred_region
        %451 = vst [vmem:[%s332] sm:$0xff] 0.0
        %452 = vst [vmem:[%s332 + $0x8] sm:$0xff] 0.0
      $region44: #{lfq_forward.1} parent=39 // pred_fallthru
        _
      %v453 = vsub.f32 %v429, %v443
      %v454 = vsub.f32 %v431, %v444
      %v455 = vsub.f32 %v435, %v445
      %v456 = vsub.f32 %v437, %v446
      %v457 = vmul.f32 %v453, %v453
      %v458 = vmul.f32 %v454, %v454
      %v459 = vmul.f32 %v455, %v455
      %v460 = vmul.f32 %v456, %v456
      %v461 = vld [vmem:[%s332] sm:$0xff]
      %v462 = vld [vmem:[%s332 + $0x8] sm:$0xff]
      %v463 = vadd.f32 %v461, %v457
      %v464 = vadd.f32 %v462, %v459
      %v465 = vadd.f32 %v463, %v458
      %v466 = vadd.f32 %v464, %v460
      %467 = vst [vmem:[%s332] sm:$0xff] %v465
      %468 = vst [vmem:[%s332 + $0x8] sm:$0xff] %v466
      %v469 = vld [vmem:[%s3] sm:$0xff]
      %v470 = vld [vmem:[%s3 + $0x8] sm:$0xff]
      %v471 = vld [vmem:[%s3 + $0x10] sm:$0xff]
      %v472 = vld [vmem:[%s3 + $0x18] sm:$0xff]
      %v473 = vld [vmem:[%s4] sm:$0xff]
      %v474 = vld [vmem:[%s4 + $0x8] sm:$0xff]
      %v475 = vld [vmem:[%s4 + $0x10] sm:$0xff]
      %v476 = vld [vmem:[%s4 + $0x18] sm:$0xff]
      %478 = vset.pattern.permute.xlu0 0
      %479 = vperm.xlu0 %478, %v473
      %v480 = vpop.permute.xlu0 %479
      %483 = vset.pattern.permute.xlu0 0
      %484 = vperm.xlu0 %483, %v474
      %v485 = vpop.permute.xlu0 %484
      %488 = vset.pattern.permute.xlu0 0
      %489 = vperm.xlu0 %488, %v475
      %v490 = vpop.permute.xlu0 %489
      %493 = vset.pattern.permute.xlu0 0
      %494 = vperm.xlu0 %493, %v476
      %v495 = vpop.permute.xlu0 %494
      %vm497 = vcmask 130048
      %v499 = vsel %vm497, %v469, 0
      %v502 = vsel %vm497, %v470, 0
      %v505 = vsel %vm497, %v471, 0
      %v508 = vsel %vm497, %v472, 0
      %510 = vmatprep.subr.mxu0 %v444
      %511 = vmatpush1.msra.mxu0 %v443
      %512 = vmatprep.subr.mxu0 %v446
      %513 = vmatpush1.msra.mxu0 %v445
      %514 = vmatprep.subr.mxu0 0.0
      %515 = vmatpush1.msra.mxu0 0.0
      %516 = vmatprep.subr.mxu0 0.0
      %517 = vmatpush1.msra.mxu0 0.0
      %518 = vmatprep.subr.mxu0 0.0
      %519 = vmatpush1.msra.mxu0 0.0
      %520 = vmatprep.subr.mxu0 0.0
      %521 = vmatpush1.msra.mxu0 0.0
      %522 = vmatprep.subr.mxu0 0.0
      %523 = vmatpush1.msra.mxu0 0.0
      %524 = vmatprep.subr.mxu0 0.0
      %525 = vmatpush1.msra.mxu0 0.0
      %526 = vmatprep.subr.mxu0 0.0
      %527 = vmatpush1.msra.mxu0 0.0
      %528 = vmatprep.subr.mxu0 0.0
      %529 = vmatpush1.msra.mxu0 0.0
      %530 = vmatprep.subr.mxu0 0.0
      %531 = vmatpush1.msra.mxu0 0.0
      %532 = vmatprep.subr.mxu0 0.0
      %533 = vmatpush1.msra.mxu0 0.0
      %534 = vmatprep.subr.mxu0 0.0
      %535 = vmatpush1.msra.mxu0 0.0
      %536 = vmatprep.subr.mxu0 0.0
      %537 = vmatpush1.msra.mxu0 0.0
      %538 = vmatprep.subr.mxu0 0.0
      %539 = vmatpush1.msra.mxu0 0.0
      %540 = vmatprep.subr.mxu0 0.0
      %541 = vmatpush1.msra.mxu0 0.0
      %542 = vmatprep.subr.mxu0 0.0
      %543 = vmatpush1.msra.mxu0 0.0
      %544 = vmatprep.subr.mxu0 0.0
      %545 = vmatpush1.msra.mxu0 0.0
      %546 = vmatprep.subr.mxu0 0.0
      %547 = vmatpush1.msra.mxu0 0.0
      %548 = vmatprep.subr.mxu0 0.0
      %549 = vmatpush1.msra.mxu0 0.0
      %550 = vmatprep.subr.mxu0 0.0
      %551 = vmatpush1.msra.mxu0 0.0
      %552 = vmatprep.subr.mxu0 0.0
      %553 = vmatpush1.msra.mxu0 0.0
      %554 = vmatprep.subr.mxu0 0.0
      %555 = vmatpush1.msra.mxu0 0.0
      %556 = vmatprep.subr.mxu0 0.0
      %557 = vmatpush1.msra.mxu0 0.0
      %558 = vmatprep.subr.mxu0 0.0
      %559 = vmatpush1.msra.mxu0 0.0
      %560 = vmatprep.subr.mxu0 0.0
      %561 = vmatpush1.msra.mxu0 0.0
      %562 = vmatprep.subr.mxu0 0.0
      %563 = vmatpush1.msra.mxu0 0.0
      %564 = vmatprep.subr.mxu0 0.0
      %565 = vmatpush1.msra.mxu0 0.0
      %566 = vmatprep.subr.mxu0 0.0
      %567 = vmatpush1.msra.mxu0 0.0
      %568 = vmatprep.subr.mxu0 0.0
      %569 = vmatpush1.msra.mxu0 0.0
      %570 = vmatprep.subr.mxu0 0.0
      %571 = vmatpush1.msra.mxu0 0.0
      %572 = vmatprep.subr.mxu0 0.0
      %573 = vmatpush1.msra.mxu0 0.0
      %574 = vmatprep.mubr.f32.mxu0 0.0
      %575 = vmatmul.mubr.f32.gmra.mrb[0].mxu0 %v499
      %v576 = vpop.f32.mrb[0].mxu0
      %v577 = vadd.f32 %v480, %v576
      %v578 = vpop.f32.mrb[0].mxu0
      %v579 = vadd.f32 %v480, %v578
      %580 = vmatprep.mubr.f32.mxu0 0.0
      %581 = vmatmul.mubr.f32.gmra.mrb[0].mxu0 %v502
      %v582 = vpop.f32.mrb[0].mxu0
      %v583 = vadd.f32 %v485, %v582
      %v584 = vpop.f32.mrb[0].mxu0
      %v585 = vadd.f32 %v485, %v584
      %586 = vmatprep.mubr.f32.mxu0 0.0
      %587 = vmatmul.mubr.f32.gmra.mrb[0].mxu0 %v505
      %v588 = vpop.f32.mrb[0].mxu0
      %v589 = vadd.f32 %v490, %v588
      %v590 = vpop.f32.mrb[0].mxu0
      %v591 = vadd.f32 %v490, %v590
      %592 = vmatprep.mubr.f32.mxu0 0.0
      %593 = vmatmul.mubr.f32.gmra.mrb[0].mxu0 %v508
      %v594 = vpop.f32.mrb[0].mxu0
      %v595 = vadd.f32 %v495, %v594
      %v596 = vpop.f32.mrb[0].mxu0
      %v597 = vadd.f32 %v495, %v596
      %598 = vdwg.mxu0
      %599 = vst [vmem:[%s321] sm:$0xff] %v577
      %600 = vst [vmem:[%s321 + $0x8] sm:$0xff] %v579
      %601 = vst [vmem:[%s321 + $0x10] sm:$0xff] %v583
      %602 = vst [vmem:[%s321 + $0x18] sm:$0xff] %v585
      %603 = vst [vmem:[%s321 + $0x20] sm:$0xff] %v589
      %604 = vst [vmem:[%s321 + $0x28] sm:$0xff] %v591
      %605 = vst [vmem:[%s321 + $0x30] sm:$0xff] %v595
      %606 = vst [vmem:[%s321 + $0x38] sm:$0xff] %v597
      %s607 = sadd.s32 %s24, %s25
      %s608 = smul.u32 2, %s607
      %p609 = scmp.lt.s32.totalorder %s23, 1
      %s610 = scalar_select %p609, %s23, 1
      %p611 = scmp.lt.s32.totalorder %s608, 1
      %s612 = scalar_select %p611, %s608, 1
      %s613 = smul.addr %s610, 8
      %s614 = sadd.s32 %s612, %s613
      %s615 = smul.addr %s614, 8
      %s616 = scalar_lea.vmem %s5, %s615
      %p617 = scmp.lt.s32.totalorder %s23, 1
      %s618 = scalar_select %p617, %s23, 1
      %p619 = scmp.lt.s32.totalorder %s24, 0
      %s620 = scalar_select %p619, %s24, 0
      %s621 = smul.addr %s620, 2
      %s622 = smul.addr %s618, 2
      %s623 = sadd.s32 %s621, %s622
      %s624 = smul.addr %s623, 8
      %s625 = scalar_lea.vmem %s6, %s624
      // Predicated region
      $region45: #{lfq_forward.1} parent=39 // pred_check
        %p626 = pneg %p173
      $region46: #{lfq_forward.1} parent=39 // pred_check_branch
        %628 = sbr.rel (%p626) target = $region48
      $region47: #{lfq_forward.1} parent=39 // pred_region
        %s629 = sadd.s32 %s24, %s25
        %s630 = smul.u32 2, %s629
      $region48: #{lfq_forward.1} parent=39 // pred_fallthru
        _
      // Predicated region
      $region49: #{lfq_forward.1} parent=39 // pred_check
        %p631 = pneg %p201
      $region50: #{lfq_forward.1} parent=39 // pred_check_branch
        %633 = sbr.rel (%p631) target = $region52
      $region51: #{lfq_forward.1} parent=39 // pred_region
        _
      $region52: #{lfq_forward.1} parent=39 // pred_fallthru
        _
    $region40: #{lfq_forward.1} parent=5 // pred_fallthru
      _
    %p634 = scmp.le.s32.totalorder 2, %s13
    // Predicated region
    $region53: #{lfq_forward.1} parent=5 // pred_check
      %p635 = pneg %p634
    $region54: #{lfq_forward.1} parent=5 // pred_check_branch
      %637 = sbr.rel (%p635) target = $region56
    $region55: #{lfq_forward.1} parent=5 // pred_region
      %s638 = ssub.s32 %s13, 2
      // Predicated region
      $region57: #{lfq_forward.1} parent=55 // pred_check
        %p639 = pneg %p179
      $region58: #{lfq_forward.1} parent=55 // pred_check_branch
        %641 = sbr.rel (%p639) target = $region60
      $region59: #{lfq_forward.1} parent=55 // pred_region
        %s642 = sadd.s32 %s27, %s28
        %s643 = smul.u32 2, %s642
        %p644 = scmp.lt.s32.totalorder %s26, 1
        %s645 = scalar_select %p644, %s26, 1
        %p646 = scmp.lt.s32.totalorder %s643, 1
        %s647 = scalar_select %p646, %s643, 1
        %s648 = smul.addr %s645, 8
        %s649 = sadd.s32 %s647, %s648
        %s650 = smul.addr %s649, 8
        %s651 = scalar_lea.vmem %s5, %s650
      $region60: #{lfq_forward.1} parent=55 // pred_fallthru
        _
      // Predicated region
      $region61: #{lfq_forward.1} parent=55 // pred_check
        %p652 = pneg %p207
      $region62: #{lfq_forward.1} parent=55 // pred_check_branch
        %654 = sbr.rel (%p652) target = $region64
      $region63: #{lfq_forward.1} parent=55 // pred_region
        %p655 = scmp.lt.s32.totalorder %s26, 1
        %s656 = scalar_select %p655, %s26, 1
        %p657 = scmp.lt.s32.totalorder %s27, 0
        %s658 = scalar_select %p657, %s27, 0
        %s659 = smul.addr %s658, 2
        %s660 = smul.addr %s656, 2
        %s661 = sadd.s32 %s659, %s660
        %s662 = smul.addr %s661, 8
        %s663 = scalar_lea.vmem %s6, %s662
      $region64: #{lfq_forward.1} parent=55 // pred_fallthru
        _
    $region56: #{lfq_forward.1} parent=5 // pred_fallthru
      _
  $region6: #{lfq_forward.1} parent=0 // loop_footer
    %s17 = sadd.s32 1, %s13
  $region7: #{lfq_forward.1} parent=0 // loop_footer_branch
    %12 = sbr.rel target = $region3
  $region8: #{lfq_forward.1} parent=0 // loop_exit
    _

</llo_original>
